<compile_context>
chip_gen: v7x
topology: tpu7x:2x2x1
jax: 0.10.0
libtpu: 0.0.40
codegen_flags: <defaults>
</compile_context>

<pallas_src>
import jax
import jax.numpy as jnp
from jax import lax
from jax.experimental import pallas as pl
from jax.experimental.pallas import tpu as pltpu

SMOOTH = 1e-5


def _round_up(x, m):
    return (x + m - 1) // m * m


def _tpu_generation():
    """Return (num_tensorcores, vmem_capacity_bytes) with safe fallbacks."""
    num_cores, vmem_bytes = 1, 64 << 20          # conservative defaults (v7x-sized VMEM)
    try:
        kind = jax.devices()[0].device_kind.lower()
    except Exception:
        kind = ""
    if "v7" in kind:                              # dual TensorCore, 64 MiB VMEM / TC
        num_cores, vmem_bytes = 2, 64 << 20
    elif any(s in kind for s in ("v5", "v6")):    # v5e / v6e: single TC, 128 MiB VMEM
        num_cores, vmem_bytes = 1, 128 << 20
    try:                                          # let the runtime refine the VMEM size
        cap = getattr(pltpu.get_tpu_info(), "vmem_capacity_bytes", None)
        if cap:
            vmem_bytes = int(cap)
    except Exception:
        pass
    return num_cores, vmem_bytes


def _auto_tile(N, C, L, itemsize, P, vmem_bytes):
    """Pick (lane tile, tiles per parallel slice) from a generation-aware budget."""
    # Budget covers double-buffered input blocks + in-kernel (N,C,T)/(N,T) temps.
    lane_budget = (40 << 20) if vmem_bytes >= (96 << 20) else (12 << 20)
    per_lane = 2 * (N * C * itemsize + N * 4) + N * C * 8 + N * 32
    max_tile = max(128, min(128 * 1024, (lane_budget // per_lane) // 128 * 128))

    if P == 1 and L <= max_tile:
        return L, 1                                # one full-extent block, no tail mask

    per_core = _round_up(-(-L // P), 128)          # lanes per parallel slice
    tile = min(max_tile, per_core)
    # Prefer a tile that divides the per-slice span (keeps every block full);
    # keep >= 512 lanes so each (n,c) DMA row segment stays >= 2 KiB.
    if per_core % tile:
        cand = tile
        while cand >= 512 and per_core % cand:
            cand -= 128
        if cand >= 512 and per_core % cand == 0:
            tile = cand
    return tile, -(-per_core // tile)


def recall_loss(logits_nchw, target_nhw, *, tile=None, num_cores=None):
    """Recall loss (weight=None path).  logits: float [N,C,H,W]; target: int [N,H,W]."""
    N, C, H, W = logits_nchw.shape
    L = H * W
    itemsize = jnp.dtype(logits_nchw.dtype).itemsize

    detected_cores, vmem_bytes = _tpu_generation()
    if num_cores is None:
        P = detected_cores if (detected_cores > 1 and L >= detected_cores * 1024) else 1
    else:
        P = max(1, int(num_cores))
    if tile is None:
        tile, ntpc = _auto_tile(N, C, L, itemsize, P, vmem_bytes)
    else:
        tile = int(tile)                           # must be a multiple of 128 (or == L)
        per_core = _round_up(-(-L // P), 128)
        ntpc = max(1, -(-per_core // tile))

    x = logits_nchw.reshape(N, C, L)
    t = target_nhw.reshape(N, L).astype(jnp.int32)

    coverage = P * ntpc * tile
    needs_mask = coverage != L                     # tail lanes / whole tail programs
    last_block = (L - 1) // tile                   # last block whose start is < L

    def kernel(x_ref, t_ref, tp_ref, tt_ref):
        # x_ref: (N, C, T) logits tile; t_ref: (N, T) int32 targets
        # tp_ref/tt_ref: (N, C) f32 accumulators, resident across the "arbitrary" axis.
        p, l = pl.program_id(0), pl.program_id(1)

        @pl.when(l == 0)
        def _init():
            tp_ref[...] = jnp.zeros_like(tp_ref)
            tt_ref[...] = jnp.zeros_like(tt_ref)

        t_blk = t_ref[...]                                         # (N, T)
        if needs_mask:
            # Lanes past L (incl. whole clamped tail programs) get class C so they
            # match neither a prediction nor any channel -> zero TP/TOT contribution.
            lane = lax.broadcasted_iota(jnp.int32, t_blk.shape, 1)
            t_blk = jnp.where(lane + (p * ntpc + l) * tile < L, t_blk, C)

        # Running argmax over channels: VPU-only max/select; strict '>' keeps the
        # lowest-index tie-break (matches jnp.argmax).  Garbage tail logits cannot
        # poison the result since `correct` is an exact 0/1 comparison.
        best = x_ref[:, 0, :]                                      # (N, T)
        pred = jnp.zeros(t_blk.shape, jnp.int32)
        for c in range(1, C):
            xc = x_ref[:, c, :]
            pred = jnp.where(xc > best, jnp.int32(c), pred)
            best = jnp.maximum(best, xc)

        correct = (pred == t_blk).astype(jnp.bfloat16)             # (N, T)

        # Target one-hot as a 0/1 bf16 mask (pred one-hot is never materialized).
        classes = lax.broadcasted_iota(
            jnp.int32, (t_blk.shape[0], C, t_blk.shape[1]), 1)
        tgt_oh = (t_blk[:, None, :] == classes).astype(jnp.bfloat16)  # (N, C, T)

        # Spatial reduction on the (otherwise idle) MXU: one batched matmul gives
        # TOT (vs ones) and TP (vs correct); 0/1 bf16 inputs + f32 accumulation
        # are exact.
        rhs = jnp.stack([jnp.ones_like(correct), correct], axis=1)    # (N, 2, T)
        both = jnp.einsum("nct,nkt->nck", tgt_oh, rhs,
                          preferred_element_type=jnp.float32)         # (N, C, 2)
        tt_ref[...] += both[:, :, 0]
        tp_ref[...] += both[:, :, 1]

    if needs_mask:
        # Clamp logical block indices that start past L onto the last valid block;
        # the in-kernel lane mask (computed from the *logical* position) zeroes
        # their contribution, so no HBM padding of either input is ever needed.
        x_map = lambda p, l: (0, 0, jnp.minimum(p * ntpc + l, last_block))
        t_map = lambda p, l: (0, jnp.minimum(p * ntpc + l, last_block))
    else:
        x_map = lambda p, l: (0, 0, p * ntpc + l)
        t_map = lambda p, l: (0, p * ntpc + l)

    # Scoped VMEM: double-buffered input blocks + in-kernel temps + headroom.
    # Kept tight on v7x (64 MiB/TC); allowed to grow on v5e/v6e (128 MiB).
    blocks = 2 * (N * C * tile * itemsize + N * tile * 4)
    interm = tile * (N * C * 8 + N * 32)
    if vmem_bytes >= (96 << 20):
        needed, cap = blocks + interm + (16 << 20), 96 << 20
    else:
        needed, cap = blocks + interm + (6 << 20), 48 << 20
    vmem_limit = int(min(cap, max(needed, 16 << 20)))

    def _call(first_axis_sem):
        return pl.pallas_call(
            kernel,
            out_shape=(
                jax.ShapeDtypeStruct((P, N, C), jnp.float32),
                jax.ShapeDtypeStruct((P, N, C), jnp.float32),
            ),
            grid_spec=pltpu.PrefetchScalarGridSpec(
                num_scalar_prefetch=0,
                grid=(P, ntpc),
                in_specs=[
                    pl.BlockSpec((N, C, tile), x_map),
                    pl.BlockSpec((N, tile), t_map),
                ],
                out_specs=[
                    pl.BlockSpec((None, N, C), lambda p, l: (p, 0, 0)),
                    pl.BlockSpec((None, N, C), lambda p, l: (p, 0, 0)),
                ],
            ),
            compiler_params=pltpu.CompilerParams(
                dimension_semantics=(first_axis_sem, "arbitrary"),
                vmem_limit_bytes=vmem_limit,
            ),
        )(x, t)

    # On dual-TC parts, CORE_PARALLEL actually shards the P axis across
    # TensorCores (plain "parallel" has near-zero codegen effect); fall back to
    # "parallel" if this build/chip rejects it.
    if P > 1 and detected_cores > 1:
        candidates = [getattr(pltpu, "CORE_PARALLEL", "parallel"), "parallel"]
    elif P > 1:
        candidates = ["parallel"]
    else:
        candidates = ["arbitrary"]

    result, last_err = None, None
    for sem in candidates:
        try:
            result = _call(sem)
            break
        except Exception as e:            # pragma: no cover - fallback path
            last_err = e
    if result is None:
        raise last_err
    tp_parts, tt_parts = result

    # Tiny epilogue in plain JAX: combine per-core partials.
    tp = jnp.sum(tp_parts, axis=0)                 # (N, C)
    tt = jnp.sum(tt_parts, axis=0)                 # (N, C)
    recall = (tp + SMOOTH) / (tt + SMOOTH)
    # TODO(synk): the optional class-`weight` path of the PyTorch module
    # (recall * weight * C, dtype-gated upstream) is not implemented here.
    return 1.0 - jnp.mean(recall)


def _recall_loss_ref(logits_nchw, target_nhw):
    """Pure-JAX reference mirroring the PyTorch forward (weight=None path)."""
    N, C = logits_nchw.shape[:2]
    x = logits_nchw.reshape(N, C, -1)
    t = target_nhw.reshape(N, -1)
    pred = jnp.argmax(x, axis=1)
    classes = jnp.arange(C)[None, :, None]
    pred_oh = (pred[:, None, :] == classes).astype(jnp.float32)
    tgt_oh = (t[:, None, :] == classes).astype(jnp.float32)
    tp = jnp.sum(pred_oh * tgt_oh, axis=2)
    tot = jnp.sum(tgt_oh, axis=2)
    recall = (tp + SMOOTH) / (tot + SMOOTH)
    return 1.0 - jnp.mean(recall)


if __name__ == "__main__":
    key = jax.random.PRNGKey(0)

    # 1) Primary shapes (aligned spatial extent, auto tiling).
    k_x, k_t, key = jax.random.split(key, 3)
    N, C, H, W = 2, 4, 16, 16
    logits = jax.random.normal(k_x, (N, C, H, W), dtype=jnp.float32)
    target = jax.random.randint(k_t, (N, H, W), 0, C, dtype=jnp.int32)
    loss = recall_loss(logits, target)
    jax.block_until_ready(loss)
    ref = _recall_loss_ref(logits, target)
    assert jnp.allclose(loss, ref, rtol=1e-5, atol=1e-5), (loss, ref)

    # 2) Non-tile-aligned spatial extent (exercises the in-kernel tail mask /
    #    partial last block instead of any HBM padding).
    k_x, k_t, key = jax.random.split(key, 3)
    logits2 = jax.random.normal(k_x, (2, 3, 13, 13), dtype=jnp.float32)
    target2 = jax.random.randint(k_t, (2, 13, 13), 0, 3, dtype=jnp.int32)
    loss2 = recall_loss(logits2, target2, tile=128)
    jax.block_until_ready(loss2)
    ref2 = _recall_loss_ref(logits2, target2)
    assert jnp.allclose(loss2, ref2, rtol=1e-5, atol=1e-5), (loss2, ref2)

    # 3) Multi-slice grid with a clamped fully-out-of-range program
    #    (exercises the index_map clamp + mask on any chip generation).
    k_x, k_t, key = jax.random.split(key, 3)
    logits3 = jax.random.normal(k_x, (2, 5, 10, 10), dtype=jnp.float32)
    target3 = jax.random.randint(k_t, (2, 10, 10), 0, 5, dtype=jnp.int32)
    loss3 = recall_loss(logits3, target3, tile=128, num_cores=2)
    jax.block_until_ready(loss3)
    ref3 = _recall_loss_ref(logits3, target3)
    assert jnp.allclose(loss3, ref3, rtol=1e-5, atol=1e-5), (loss3, ref3)

    print("KERNEL_OK")
</pallas_src>

<mosaic_0001>
module attributes {stable_mosaic.version = 11 : i64} {
  func.func @kernel(%arg0: i32, %arg1: i32, %arg2: memref<2x4x256xf32, #tpu.memory_space<vmem>>, %arg3: memref<2x256xi32, #tpu.memory_space<vmem>>, %arg4: memref<1x2x4xf32, #tpu.memory_space<vmem>>, %arg5: memref<1x2x4xf32, #tpu.memory_space<vmem>>) attributes {dimension_semantics = [#tpu.dimension_semantics<arbitrary>, #tpu.dimension_semantics<arbitrary>], iteration_bounds = array<i64: 1, 1>, scalar_prefetch = 0 : i64, scratch_operands = 0 : i64, tpu.core_type = #tpu.core_type<tc>, window_params = [{transform_indices = @transform_0, window_bounds = array<i64: 2, 4, 256>}, {transform_indices = @transform_1, window_bounds = array<i64: 2, 256>}, {transform_indices = @transform_2, window_bounds = array<i64: 1, 2, 4>}, {transform_indices = @transform_3, window_bounds = array<i64: 1, 2, 4>}]} {
    %c0_i32 = arith.constant 0 : i32
    %0 = arith.cmpi eq, %arg1, %c0_i32 : i32
    %1 = arith.extui %0 : i1 to i32
    %c0_i32_0 = arith.constant 0 : i32
    %2 = arith.cmpi ne, %1, %c0_i32_0 : i32
    scf.if %2 {
      %cst_25 = arith.constant 0.000000e+00 : f32
      %56 = vector.broadcast %cst_25 : f32 to vector<2x4xf32>
      %c0_26 = arith.constant 0 : index
      %c0_27 = arith.constant 0 : index
      %c0_28 = arith.constant 0 : index
      %57 = vector.load %arg4[%c0_26, %c0_27, %c0_28] : memref<1x2x4xf32, #tpu.memory_space<vmem>>, vector<1x2x4xf32>
      %58 = vector.shape_cast %57 : vector<1x2x4xf32> to vector<2x4xf32>
      %59 = vector.shape_cast %56 : vector<2x4xf32> to vector<1x2x4xf32>
      tpu.vector_store %arg4[%c0_26, %c0_27, %c0_28], %59 {strides = array<i32>} : memref<1x2x4xf32, #tpu.memory_space<vmem>>, vector<1x2x4xf32>,
      %cst_29 = arith.constant 0.000000e+00 : f32
      %60 = vector.broadcast %cst_29 : f32 to vector<2x4xf32>
      %c0_30 = arith.constant 0 : index
      %c0_31 = arith.constant 0 : index
      %c0_32 = arith.constant 0 : index
      %61 = vector.load %arg5[%c0_30, %c0_31, %c0_32] : memref<1x2x4xf32, #tpu.memory_space<vmem>>, vector<1x2x4xf32>
      %62 = vector.shape_cast %61 : vector<1x2x4xf32> to vector<2x4xf32>
      %63 = vector.shape_cast %60 : vector<2x4xf32> to vector<1x2x4xf32>
      tpu.vector_store %arg5[%c0_30, %c0_31, %c0_32], %63 {strides = array<i32>} : memref<1x2x4xf32, #tpu.memory_space<vmem>>, vector<1x2x4xf32>,
    } else {
    }
    %c0 = arith.constant 0 : index
    %c0_1 = arith.constant 0 : index
    %3 = vector.load %arg3[%c0, %c0_1] : memref<2x256xi32, #tpu.memory_space<vmem>>, vector<2x256xi32>
    %c0_2 = arith.constant 0 : index
    %c0_3 = arith.constant 0 : index
    %c0_4 = arith.constant 0 : index
    %4 = vector.load %arg2[%c0_2, %c0_3, %c0_4] : memref<2x4x256xf32, #tpu.memory_space<vmem>>, vector<2x1x256xf32>
    %5 = vector.shape_cast %4 : vector<2x1x256xf32> to vector<2x256xf32>
    %c0_i32_5 = arith.constant 0 : i32
    %6 = vector.broadcast %c0_i32_5 : i32 to vector<2x256xi32>
    %c0_6 = arith.constant 0 : index
    %c1 = arith.constant 1 : index
    %c0_7 = arith.constant 0 : index
    %7 = vector.load %arg2[%c0_6, %c1, %c0_7] : memref<2x4x256xf32, #tpu.memory_space<vmem>>, vector<2x1x256xf32>
    %8 = vector.shape_cast %7 : vector<2x1x256xf32> to vector<2x256xf32>
    %9 = arith.cmpf ogt, %8, %5 : vector<2x256xf32>
    %c1_i32 = arith.constant 1 : i32
    %10 = vector.broadcast %c1_i32 : i32 to vector<2x256xi32>
    %11 = arith.select %9, %10, %6 : vector<2x256xi1>, vector<2x256xi32>
    %12 = arith.maximumf %5, %8 : vector<2x256xf32>
    %c0_8 = arith.constant 0 : index
    %c2 = arith.constant 2 : index
    %c0_9 = arith.constant 0 : index
    %13 = vector.load %arg2[%c0_8, %c2, %c0_9] : memref<2x4x256xf32, #tpu.memory_space<vmem>>, vector<2x1x256xf32>
    %14 = vector.shape_cast %13 : vector<2x1x256xf32> to vector<2x256xf32>
    %15 = arith.cmpf ogt, %14, %12 : vector<2x256xf32>
    %c2_i32 = arith.constant 2 : i32
    %16 = vector.broadcast %c2_i32 : i32 to vector<2x256xi32>
    %17 = arith.select %15, %16, %11 : vector<2x256xi1>, vector<2x256xi32>
    %18 = arith.maximumf %12, %14 : vector<2x256xf32>
    %c0_10 = arith.constant 0 : index
    %c3 = arith.constant 3 : index
    %c0_11 = arith.constant 0 : index
    %19 = vector.load %arg2[%c0_10, %c3, %c0_11] : memref<2x4x256xf32, #tpu.memory_space<vmem>>, vector<2x1x256xf32>
    %20 = vector.shape_cast %19 : vector<2x1x256xf32> to vector<2x256xf32>
    %21 = arith.cmpf ogt, %20, %18 : vector<2x256xf32>
    %c3_i32 = arith.constant 3 : i32
    %22 = vector.broadcast %c3_i32 : i32 to vector<2x256xi32>
    %23 = arith.select %21, %22, %17 : vector<2x256xi1>, vector<2x256xi32>
    %24 = arith.cmpi eq, %23, %3 : vector<2x256xi32>
    %25 = arith.extui %24 : vector<2x256xi1> to vector<2x256xi32>
    %26 = arith.sitofp %25 : vector<2x256xi32> to vector<2x256xf32>
    %27 = arith.truncf %26 : vector<2x256xf32> to vector<2x256xbf16>
    %28 = tpu.iota {dimensions = array<i32: 1>} : vector<2x4x256xi32>
    %29 = vector.shape_cast %3 : vector<2x256xi32> to vector<2x1x256xi32>
    %30 = vector.broadcast %29 : vector<2x1x256xi32> to vector<2x4x256xi32>
    %31 = arith.cmpi eq, %30, %28 : vector<2x4x256xi32>
    %32 = arith.extui %31 : vector<2x4x256xi1> to vector<2x4x256xi32>
    %33 = arith.sitofp %32 : vector<2x4x256xi32> to vector<2x4x256xf32>
    %34 = arith.truncf %33 : vector<2x4x256xf32> to vector<2x4x256xbf16>
    %cst = arith.constant 1.000000e+00 : bf16
    %35 = vector.broadcast %cst : bf16 to vector<2x256xbf16>
    %36 = vector.shape_cast %35 : vector<2x256xbf16> to vector<2x1x256xbf16>
    %37 = vector.shape_cast %27 : vector<2x256xbf16> to vector<2x1x256xbf16>
    %38 = tpu.concatenate %36, %37 in 1 : vector<2x1x256xbf16>, vector<2x1x256xbf16> -> vector<2x2x256xbf16>
    "tpu.trace_start"() <{level = 10 : i32, message = "nct,nkt->nck"}> : () -> ()
    %cst_12 = arith.constant dense<0.000000e+00> : vector<2x4x2xf32>
    %39 = tpu.matmul %34, %38, %cst_12 {dimension_numbers = #tpu.dot_dimension_numbers<[2], [2], [1], [1], [0, 0, 0, 1, 1, 1], [0], [0]>} : vector<2x4x256xbf16>, vector<2x2x256xbf16>, vector<2x4x2xf32> -> vector<2x4x2xf32>
    "tpu.trace_stop"() : () -> ()
    %c0_13 = arith.constant 0 : index
    %c0_14 = arith.constant 0 : index
    %c0_15 = arith.constant 0 : index
    %40 = vector.load %arg5[%c0_13, %c0_14, %c0_15] : memref<1x2x4xf32, #tpu.memory_space<vmem>>, vector<1x2x4xf32>
    %41 = vector.shape_cast %40 : vector<1x2x4xf32> to vector<2x4xf32>
    %42 = vector.extract_strided_slice %39 {offsets = [0, 0, 0], sizes = [2, 4, 1], strides = [1, 1, 1]} : vector<2x4x2xf32> to vector<2x4x1xf32>
    %43 = vector.shape_cast %42 : vector<2x4x1xf32> to vector<2x4xf32>
    %44 = arith.addf %41, %43 : vector<2x4xf32>
    %c0_16 = arith.constant 0 : index
    %c0_17 = arith.constant 0 : index
    %c0_18 = arith.constant 0 : index
    %45 = vector.load %arg5[%c0_16, %c0_17, %c0_18] : memref<1x2x4xf32, #tpu.memory_space<vmem>>, vector<1x2x4xf32>
    %46 = vector.shape_cast %45 : vector<1x2x4xf32> to vector<2x4xf32>
    %47 = vector.shape_cast %44 : vector<2x4xf32> to vector<1x2x4xf32>
    tpu.vector_store %arg5[%c0_16, %c0_17, %c0_18], %47 {strides = array<i32>} : memref<1x2x4xf32, #tpu.memory_space<vmem>>, vector<1x2x4xf32>,
    %c0_19 = arith.constant 0 : index
    %c0_20 = arith.constant 0 : index
    %c0_21 = arith.constant 0 : index
    %48 = vector.load %arg4[%c0_19, %c0_20, %c0_21] : memref<1x2x4xf32, #tpu.memory_space<vmem>>, vector<1x2x4xf32>
    %49 = vector.shape_cast %48 : vector<1x2x4xf32> to vector<2x4xf32>
    %50 = vector.extract_strided_slice %39 {offsets = [0, 0, 1], sizes = [2, 4, 1], strides = [1, 1, 1]} : vector<2x4x2xf32> to vector<2x4x1xf32>
    %51 = vector.shape_cast %50 : vector<2x4x1xf32> to vector<2x4xf32>
    %52 = arith.addf %49, %51 : vector<2x4xf32>
    %c0_22 = arith.constant 0 : index
    %c0_23 = arith.constant 0 : index
    %c0_24 = arith.constant 0 : index
    %53 = vector.load %arg4[%c0_22, %c0_23, %c0_24] : memref<1x2x4xf32, #tpu.memory_space<vmem>>, vector<1x2x4xf32>
    %54 = vector.shape_cast %53 : vector<1x2x4xf32> to vector<2x4xf32>
    %55 = vector.shape_cast %52 : vector<2x4xf32> to vector<1x2x4xf32>
    tpu.vector_store %arg4[%c0_22, %c0_23, %c0_24], %55 {strides = array<i32>} : memref<1x2x4xf32, #tpu.memory_space<vmem>>, vector<1x2x4xf32>,
    return
  }
  func.func @transform_0(%arg0: i32, %arg1: i32) -> (i32, i32, i32) {
    %c1_i32 = arith.constant 1 : i32
    %0 = arith.muli %arg0, %c1_i32 : i32
    %1 = arith.addi %0, %arg1 : i32
    %c0_i32 = arith.constant 0 : i32
    %c0_i32_0 = arith.constant 0 : i32
    %c0_i32_1 = arith.constant 0 : i32
    return %c0_i32, %c0_i32_0, %1 : i32, i32, i32
  }
  func.func @transform_1(%arg0: i32, %arg1: i32) -> (i32, i32) {
    %c1_i32 = arith.constant 1 : i32
    %0 = arith.muli %arg0, %c1_i32 : i32
    %1 = arith.addi %0, %arg1 : i32
    %c0_i32 = arith.constant 0 : i32
    %c0_i32_0 = arith.constant 0 : i32
    return %c0_i32, %1 : i32, i32
  }
  func.func @transform_2(%arg0: i32, %arg1: i32) -> (i32, i32, i32) {
    %c0_i32 = arith.constant 0 : i32
    %c0_i32_0 = arith.constant 0 : i32
    %c0_i32_1 = arith.constant 0 : i32
    return %arg0, %c0_i32, %c0_i32_0 : i32, i32, i32
  }
  func.func @transform_3(%arg0: i32, %arg1: i32) -> (i32, i32, i32) {
    %c0_i32 = arith.constant 0 : i32
    %c0_i32_0 = arith.constant 0 : i32
    %c0_i32_1 = arith.constant 0 : i32
    return %arg0, %c0_i32, %c0_i32_0 : i32, i32, i32
  }
}

</mosaic_0001>

<llo_original>
// kernel: tpu_custom_call.1
$region0: #{tpu_custom_call.1}
  #allocation0 [shape = 'u32[]', space=smem, size = 0x4, offset = 0x4, fixed_abs, tag = 'smem constant byte address 0x4 - core index']
  #allocation1 [shape = 'u32[144,128]{1,0:T(1,128)}', space=vmem, size = 0x12000, scoped, tag = 'internal scratch']
  %s0 = inlined_call_operand.hbm [shape: f32[2,4,256], index: 0, kind: input, shape index: {}]
  %s1 = inlined_call_operand.hbm [shape: s32[2,256], index: 1, kind: input, shape index: {}]
  %s2 = inlined_call_operand.hbm [shape: f32[1,2,4], index: 2, kind: output, shape index: {0}]
  %s3 = inlined_call_operand.hbm [shape: f32[1,2,4], index: 3, kind: output, shape index: {1}]
  %4 = xla_tuple %s2, %s3
  %s5 = sld [smem:[#allocation0]]
  $region38: #{tpu_custom_call.1} parent=0
    _
  %s7 = ssub.s32 1, %s5
  %s8 = scalar_select 0, %s7, %s5
  $region1: #{tpu_custom_call.1} parent=0
    #allocation2 [shape = 'u8[8192]{0}', space=vmem, size = 0x2000, scoped, tag = 'input window, operand 0, single buffered']
    #allocation3 [shape = 's32[1]{0}', space=sflag, size = 0x4, scoped, tag = 'scoped memory for tpu_custom_call.1']
    #allocation4 [shape = 's32[1]{0}', space=sflag, size = 0x4, scoped, tag = 'scoped memory for tpu_custom_call.1']
    #allocation5 [shape = 'u8[2048]{0}', space=vmem, size = 0x800, scoped, tag = 'input window, operand 1, single buffered']
    #allocation6 [shape = 's32[1]{0}', space=sflag, size = 0x4, scoped, tag = 'scoped memory for tpu_custom_call.1']
    #allocation7 [shape = 'u8[1024]{0}', space=vmem, size = 0x400, scoped, tag = 'output window, operand 0, single buffered']
    #allocation8 [shape = 'u8[1024]{0}', space=vmem, size = 0x400, scoped, tag = 'output window, operand 1, single buffered']
    #allocation9 [shape = 's32[1]{0}', space=sflag, size = 0x4, scoped, tag = 'scoped memory for tpu_custom_call.1']
    %9 = vsyncpa [#allocation3], 0
    %10 = vsyncpa [#allocation6], 0
    %11 = vsyncpa [#allocation4], 0
    %12 = vsyncpa [#allocation9], 0
    // Predicated region
    $region2: #{tpu_custom_call.1} parent=1 // pred_check
      _
    $region3: #{tpu_custom_call.1} parent=1 // pred_check_branch
      %14 = sbr.rel (0) target = $region5
    $region4: #{tpu_custom_call.1} parent=1 // pred_region
      %s15 = sadd.s32 0, 0
      %s16 = smul.u32 2, %s15
      %s18 = ssub.s32 256, 256
      %19 = vsyncadd [#allocation3], %s18
      %s20 = smul.addr %s16, 64
      %s21 = scalar_lea.hbm %s0, %s20
      %s22 = sshll.u32 [#allocation2], 4
      %s23 = int_to_ptr.vmem [resolvable:$true] %s22
      %28 = dma.hbm_to_vmem [thread:$0]  %s21, 256, %s23, [#allocation3], 128, 128, 8
    $region5: #{tpu_custom_call.1} parent=1 // pred_fallthru
      _
    // Predicated region
    $region6: #{tpu_custom_call.1} parent=1 // pred_check
      _
    $region7: #{tpu_custom_call.1} parent=1 // pred_check_branch
      %30 = sbr.rel (0) target = $region9
    $region8: #{tpu_custom_call.1} parent=1 // pred_region
      %s31 = sadd.s32 0, 0
      %s32 = smul.u32 2, %s31
      %s34 = ssub.s32 64, 64
      %35 = vsyncadd [#allocation6], %s34
      %s36 = smul.addr %s32, 32
      %s37 = scalar_lea.hbm %s1, %s36
      %s39 = sshll.u32 [#allocation5], 4
      %s40 = int_to_ptr.vmem [resolvable:$true] %s39
      %42 = dma.hbm_to_vmem [thread:$0]  %s37, 64, %s40, [#allocation6]
    $region9: #{tpu_custom_call.1} parent=1 // pred_fallthru
      _
    // Predicated region
    $region10: #{tpu_custom_call.1} parent=1 // pred_check
      _
    $region11: #{tpu_custom_call.1} parent=1 // pred_check_branch
      %44 = sbr.rel (0) target = $region13
    $region12: #{tpu_custom_call.1} parent=1 // pred_region
      %45 = dma.done [#allocation3], 256
    $region13: #{tpu_custom_call.1} parent=1 // pred_fallthru
      _
    // Predicated region
    $region14: #{tpu_custom_call.1} parent=1 // pred_check
      _
    $region15: #{tpu_custom_call.1} parent=1 // pred_check_branch
      %47 = sbr.rel (0) target = $region17
    $region16: #{tpu_custom_call.1} parent=1 // pred_region
      %48 = dma.done [#allocation6], 64
    $region17: #{tpu_custom_call.1} parent=1 // pred_fallthru
      _
    %s49 = sadd.s32 0, 0
    %s50 = smul.u32 2, %s49
    %s51 = sadd.s32 0, 0
    %s52 = smul.u32 2, %s51
    %p55 = scmp.eq.s32.totalorder 0, 0
    // Predicated region
    $region18: #{tpu_custom_call.1} parent=1 // pred_check
      %p56 = pneg %p55
    $region19: #{tpu_custom_call.1} parent=1 // pred_check_branch
      %58 = sbr.rel (%p56) target = $region21
    $region20: #{tpu_custom_call.1} parent=1 // pred_region
      %vm59 = vcmask 25600
      %60 = vst.msk [vmem:[#allocation7] sm:$0x3] %vm59, 0.0
      %61 = vst.msk [vmem:[#allocation8] sm:$0x3] %vm59, 0.0
    $region21: #{tpu_custom_call.1} parent=1 // pred_fallthru
      _
    %v62 = vld [vmem:[#allocation5] sm:$0xf]
    %v63 = vld [vmem:[#allocation2] ss:$4 sm:$0x3]
    %s64 = scalar_lea.vmem [#allocation2], 8
    %v65 = vld [vmem:[%s64] ss:$4 sm:$0x3]
    %s66 = scalar_lea.vmem [#allocation2], 1
    %v67 = vld [vmem:[%s66] ss:$4 sm:$0x3]
    %s68 = scalar_lea.vmem [#allocation2], 9
    %v69 = vld [vmem:[%s68] ss:$4 sm:$0x3]
    %vm70 = vcmp.gt.f32.partialorder %v67, %v63
    %vm71 = vcmp.gt.f32.partialorder %v69, %v65
    %v72 = vsel %vm70, 1, 0
    %v73 = vsel %vm71, 1, 0
    %v74 = vmax.f32 %v63, %v67
    %v75 = vmax.f32 %v65, %v69
    %s76 = scalar_lea.vmem [#allocation2], 2
    %v77 = vld [vmem:[%s76] ss:$4 sm:$0x3]
    %s78 = scalar_lea.vmem [#allocation2], 10
    %v79 = vld [vmem:[%s78] ss:$4 sm:$0x3]
    %vm80 = vcmp.gt.f32.partialorder %v77, %v74
    %vm81 = vcmp.gt.f32.partialorder %v79, %v75
    %v82 = vsel %vm80, 2, %v72
    %v83 = vsel %vm81, 2, %v73
    %v84 = vmax.f32 %v74, %v77
    %v85 = vmax.f32 %v75, %v79
    %s86 = scalar_lea.vmem [#allocation2], 3
    %v87 = vld [vmem:[%s86] ss:$4 sm:$0x3]
    %s88 = scalar_lea.vmem [#allocation2], 11
    %v89 = vld [vmem:[%s88] ss:$4 sm:$0x3]
    %vm90 = vcmp.gt.f32.partialorder %v87, %v84
    %vm91 = vcmp.gt.f32.partialorder %v89, %v85
    %v92 = vsel %vm90, 3, %v82
    %v93 = vsel %vm91, 3, %v83
    %v95 = vunpack.c.l.s4 1966171168
    %v96 = vunpack.c.0.s8 %v95
    %v97 = vlaneseq
    %v98 = vshrl.u32 %v97, 7
    %v99 = vsub.s32 %v96, %v98
    %v100 = vrot.slane %v62, %v99
    %v101 = vcombine.high %v100, %v100
    %vm102 = vcmp.eq.s32.totalorder %v92, %v100
    %vm103 = vcmp.eq.s32.totalorder %v93, %v101
    %v104 = vsel %vm102, 1, 0
    %v105 = vsel %vm103, 1, 0
    %v106 = vcvt.s32.f32 %v104
    %v107 = vcvt.s32.f32 %v105
    %v110 = vlaneseq
    %v111 = vshrl.u32 %v110, 7
    %v112 = vsub.s32 0, %v111
    %v113 = vrot.slane %v106, %v112
    %v114 = vlaneseq
    %v115 = vshrl.u32 %v114, 7
    %v116 = vsub.s32 1, %v115
    %v117 = vrot.slane %v106, %v116
    %v118 = vlaneseq
    %v119 = vshrl.u32 %v118, 7
    %v120 = vsub.s32 0, %v119
    %v121 = vrot.slane %v107, %v120
    %v122 = vlaneseq
    %v123 = vshrl.u32 %v122, 7
    %v124 = vsub.s32 1, %v123
    %v125 = vrot.slane %v107, %v124
    %v130 = vpack.c.bf16 %v113, %v113
    %v131 = vpack.c.bf16 %v117, %v117
    %v132 = vpack.c.bf16 %v121, %v121
    %v133 = vpack.c.bf16 %v125, %v125
    %v134 = vlaneseq
    %v135 = vshrl.u32 %v134, 7
    %v136 = vlaneseq
    %v137 = vshrl.u32 %v136, 7
    %v138 = vsub.s32 0, %v137
    %v139 = vrot.slane %v100, %v138
    %v140 = vlaneseq
    %v141 = vshrl.u32 %v140, 7
    %v142 = vsub.s32 1, %v141
    %v143 = vrot.slane %v100, %v142
    %v144 = vlaneseq
    %v145 = vshrl.u32 %v144, 7
    %v146 = vsub.s32 0, %v145
    %v147 = vrot.slane %v101, %v146
    %v148 = vlaneseq
    %v149 = vshrl.u32 %v148, 7
    %v150 = vsub.s32 1, %v149
    %v151 = vrot.slane %v101, %v150
    %vm152 = vcmp.eq.s32.totalorder %v139, %v135
    %vm153 = vcmp.eq.s32.totalorder %v143, %v135
    %vm154 = vcmp.eq.s32.totalorder %v147, %v135
    %vm155 = vcmp.eq.s32.totalorder %v151, %v135
    %v156 = vsel %vm152, 1, 0
    %v157 = vsel %vm153, 1, 0
    %v158 = vsel %vm154, 1, 0
    %v159 = vsel %vm155, 1, 0
    %v160 = vcvt.s32.f32 %v156
    %v161 = vcvt.s32.f32 %v157
    %v162 = vcvt.s32.f32 %v158
    %v163 = vcvt.s32.f32 %v159
    %v164 = vpack.c.bf16 %v160, %v160
    %v165 = vpack.c.bf16 %v161, %v161
    %v166 = vpack.c.bf16 %v162, %v162
    %v167 = vpack.c.bf16 %v163, %v163
    %v169 = vshll.u32 %v130, 16
    %v172 = vshll.u32 %v131, 16
    %v175 = vshll.u32 %v132, 16
    %v178 = vshll.u32 %v133, 16
    %vm184 = vcmask 1040384
    %vm185 = vsmask.f32 256
    %vm186 = vmand %vm184, %vm185
    %v187 = vsel %vm186, 1065369472, %v169
    %v188 = vsel %vm186, 1065369472, %v172
    %v189 = vsel %vm186, 1065369472, %v175
    %v190 = vsel %vm186, 1065369472, %v178
    %191 = vmatprep.subr.bf16.mxu0 %v188
    %192 = vmatpush1.bf16.xpose.msra.mxu0 %v187
    %193 = vmatprep.subr.bf16.mxu0 0
    %194 = vmatpush1.bf16.xpose.msra.mxu0 0
    %195 = vmatprep.subr.bf16.mxu0 0
    %196 = vmatpush1.bf16.xpose.msra.mxu0 0
    %197 = vmatprep.subr.bf16.mxu0 0
    %198 = vmatpush1.bf16.xpose.msra.mxu0 0
    %199 = vmatprep.subr.bf16.mxu0 0
    %200 = vmatpush1.bf16.xpose.msra.mxu0 0
    %201 = vmatprep.subr.bf16.mxu0 0
    %202 = vmatpush1.bf16.xpose.msra.mxu0 0
    %203 = vmatprep.subr.bf16.mxu0 0
    %204 = vmatpush1.bf16.xpose.msra.mxu0 0
    %205 = vmatprep.subr.bf16.mxu0 0
    %206 = vmatpush1.bf16.xpose.msra.mxu0 0
    %207 = vmatprep.subr.bf16.mxu0 0
    %208 = vmatpush1.bf16.xpose.msra.mxu0 0
    %209 = vmatprep.subr.bf16.mxu0 0
    %210 = vmatpush1.bf16.xpose.msra.mxu0 0
    %211 = vmatprep.subr.bf16.mxu0 0
    %212 = vmatpush1.bf16.xpose.msra.mxu0 0
    %213 = vmatprep.subr.bf16.mxu0 0
    %214 = vmatpush1.bf16.xpose.msra.mxu0 0
    %215 = vmatprep.subr.bf16.mxu0 0
    %216 = vmatpush1.bf16.xpose.msra.mxu0 0
    %217 = vmatprep.subr.bf16.mxu0 0
    %218 = vmatpush1.bf16.xpose.msra.mxu0 0
    %219 = vmatprep.subr.bf16.mxu0 0
    %220 = vmatpush1.bf16.xpose.msra.mxu0 0
    %221 = vmatprep.subr.bf16.mxu0 0
    %222 = vmatpush1.bf16.xpose.msra.mxu0 0
    %223 = vmatprep.mubr.bf16.mxu0 %v165
    %224 = vmatmul.mubr.bf16.gmra.mrb[0].mxu0 %v164
    %v225 = vpop.f32.mrb[0].mxu0
    %v226 = vadd.f32 0.0, %v225
    %v227 = vpop.f32.mrb[0].mxu0
    %v228 = vpop.f32.mrb[0].mxu0
    %v229 = vpop.f32.mrb[0].mxu0
    %230 = vdwg.mxu0
    %231 = vmatprep.subr.bf16.mxu0 %v190
    %232 = vmatpush1.bf16.xpose.msra.mxu0 %v189
    %233 = vmatprep.subr.bf16.mxu0 0
    %234 = vmatpush1.bf16.xpose.msra.mxu0 0
    %235 = vmatprep.subr.bf16.mxu0 0
    %236 = vmatpush1.bf16.xpose.msra.mxu0 0
    %237 = vmatprep.subr.bf16.mxu0 0
    %238 = vmatpush1.bf16.xpose.msra.mxu0 0
    %239 = vmatprep.subr.bf16.mxu0 0
    %240 = vmatpush1.bf16.xpose.msra.mxu0 0
    %241 = vmatprep.subr.bf16.mxu0 0
    %242 = vmatpush1.bf16.xpose.msra.mxu0 0
    %243 = vmatprep.subr.bf16.mxu0 0
    %244 = vmatpush1.bf16.xpose.msra.mxu0 0
    %245 = vmatprep.subr.bf16.mxu0 0
    %246 = vmatpush1.bf16.xpose.msra.mxu0 0
    %247 = vmatprep.subr.bf16.mxu0 0
    %248 = vmatpush1.bf16.xpose.msra.mxu0 0
    %249 = vmatprep.subr.bf16.mxu0 0
    %250 = vmatpush1.bf16.xpose.msra.mxu0 0
    %251 = vmatprep.subr.bf16.mxu0 0
    %252 = vmatpush1.bf16.xpose.msra.mxu0 0
    %253 = vmatprep.subr.bf16.mxu0 0
    %254 = vmatpush1.bf16.xpose.msra.mxu0 0
    %255 = vmatprep.subr.bf16.mxu0 0
    %256 = vmatpush1.bf16.xpose.msra.mxu0 0
    %257 = vmatprep.subr.bf16.mxu0 0
    %258 = vmatpush1.bf16.xpose.msra.mxu0 0
    %259 = vmatprep.subr.bf16.mxu0 0
    %260 = vmatpush1.bf16.xpose.msra.mxu0 0
    %261 = vmatprep.subr.bf16.mxu0 0
    %262 = vmatpush1.bf16.xpose.msra.mxu0 0
    %263 = vmatprep.mubr.bf16.mxu0 %v167
    %264 = vmatmul.mubr.bf16.gmra.mrb[0].mxu0 %v166
    %v265 = vpop.f32.mrb[0].mxu0
    %v266 = vadd.f32 0.0, %v265
    %v267 = vpop.f32.mrb[0].mxu0
    %v268 = vpop.f32.mrb[0].mxu0
    %v269 = vpop.f32.mrb[0].mxu0
    %270 = vdwg.mxu0
    %v271 = vld [vmem:[#allocation8] sm:$0x3]
    %274 = vset.pattern.permute.xlu0 0
    %275 = vperm.xlu0 %274, %v226
    %v276 = vpop.permute.xlu0 %275
    %277 = vset.pattern.permute.xlu0 0
    %278 = vperm.xlu0 %277, %v266
    %v279 = vpop.permute.xlu0 %278
    %v280 = vlaneseq
    %v281 = vand.u32 %v280, 127
    %v282 = vlaneseq
    %v283 = vshrl.u32 %v282, 7
    %v284 = vsub.s32 %v281, %v283
    %v285 = vrot.slane %v276, %v284
    %v286 = vlaneseq
    %v287 = vshrl.u32 %v286, 7
    %v288 = vsub.s32 %v281, %v287
    %v289 = vrot.slane %v279, %v288
    %vm290 = vcmask 1041409
    %v291 = vsel %vm290, %v289, %v285
    %v293 = vadd.f32 %v271, %v291
    %vm294 = vcmask 25600
    %295 = vst.msk [vmem:[#allocation8] sm:$0x3] %vm294, %v293
    %v296 = vld [vmem:[#allocation7] sm:$0x3]
    %297 = vset.pattern.permute.xlu0 1
    %298 = vperm.xlu0 %297, %v226
    %v299 = vpop.permute.xlu0 %298
    %300 = vset.pattern.permute.xlu0 1
    %301 = vperm.xlu0 %300, %v266
    %v302 = vpop.permute.xlu0 %301
    %v303 = vlaneseq
    %v304 = vshrl.u32 %v303, 7
    %v305 = vsub.s32 %v281, %v304
    %v306 = vrot.slane %v299, %v305
    %v307 = vlaneseq
    %v308 = vshrl.u32 %v307, 7
    %v309 = vsub.s32 %v281, %v308
    %v310 = vrot.slane %v302, %v309
    %v311 = vsel %vm290, %v310, %v306
    %v313 = vadd.f32 %v296, %v311
    %314 = vst.msk [vmem:[#allocation7] sm:$0x3] %vm294, %v313
    // Predicated region
    $region22: #{tpu_custom_call.1} parent=1 // pred_check
      _
    $region23: #{tpu_custom_call.1} parent=1 // pred_check_branch
      %316 = sbr.rel (0) target = $region25
    $region24: #{tpu_custom_call.1} parent=1 // pred_region
      %s318 = ssub.s32 32, 32
      %319 = vsyncadd [#allocation4], %s318
      %s321 = sshll.u32 [#allocation7], 4
      %s322 = int_to_ptr.vmem [resolvable:$true] %s321
      %324 = dma.vmem_to_hbm [thread:$0]  %s322, 32, %s2, [#allocation4]
    $region25: #{tpu_custom_call.1} parent=1 // pred_fallthru
      _
    // Predicated region
    $region26: #{tpu_custom_call.1} parent=1 // pred_check
      _
    $region27: #{tpu_custom_call.1} parent=1 // pred_check_branch
      %326 = sbr.rel (0) target = $region29
    $region28: #{tpu_custom_call.1} parent=1 // pred_region
      %s328 = ssub.s32 32, 32
      %329 = vsyncadd [#allocation9], %s328
      %s331 = sshll.u32 [#allocation8], 4
      %s332 = int_to_ptr.vmem [resolvable:$true] %s331
      %334 = dma.vmem_to_hbm [thread:$0]  %s332, 32, %s3, [#allocation9]
    $region29: #{tpu_custom_call.1} parent=1 // pred_fallthru
      _
    // Predicated region
    $region30: #{tpu_custom_call.1} parent=1 // pred_check
      _
    $region31: #{tpu_custom_call.1} parent=1 // pred_check_branch
      %336 = sbr.rel (0) target = $region33
    $region32: #{tpu_custom_call.1} parent=1 // pred_region
      %337 = dma.done [#allocation4], 32
    $region33: #{tpu_custom_call.1} parent=1 // pred_fallthru
      _
    // Predicated region
    $region34: #{tpu_custom_call.1} parent=1 // pred_check
      _
    $region35: #{tpu_custom_call.1} parent=1 // pred_check_branch
      %339 = sbr.rel (0) target = $region37
    $region36: #{tpu_custom_call.1} parent=1 // pred_region
      %340 = dma.done [#allocation9], 32
    $region37: #{tpu_custom_call.1} parent=1 // pred_fallthru
      _
    %341 = vsyncpa [#allocation3], 1
    %342 = vsyncpa [#allocation6], 1
    %343 = vsyncpa [#allocation4], 1
    %344 = vsyncpa [#allocation9], 1

</llo_original>
